<compile_context>
chip_gen: v5e
topology: v5e:2x2
jax: 0.10.0
libtpu: 0.0.40
codegen_flags: <defaults>
</compile_context>

<pallas_src>
import numpy as np
import jax
import jax.numpy as jnp
from jax import lax
from jax.experimental import pallas as pl
from jax.experimental.pallas import tpu as pltpu


# ----------------------------------------------------------------------------
# Rotary matrix construction (reference glue, matches the torch code exactly)
# ----------------------------------------------------------------------------
def get_rotary_matrix_np(context_window, embedding_dim):
    R = np.zeros((context_window, embedding_dim, embedding_dim), dtype=np.float64)
    for position in range(context_window):
        for i in range(embedding_dim // 2):
            theta = 10000.0 ** (-2.0 * (i - 1) / embedding_dim)
            m_theta = position * theta
            R[position, 2 * i, 2 * i] = np.cos(m_theta)
            R[position, 2 * i, 2 * i + 1] = -np.sin(m_theta)
            R[position, 2 * i + 1, 2 * i] = np.sin(m_theta)
            R[position, 2 * i + 1, 2 * i + 1] = np.cos(m_theta)
    return R.astype(np.float32)


def rope_half_tables(context_window, embedding_dim):
    """cos / signed-sin tables in rotate-half (even-pairs | odd-pairs) layout.

    In this layout lane j pairs with lane (j + d/2) mod d, and
      rot[j] = cos[j] * t[j] + sin[j] * t[partner(j)]
    reproduces q @ R_p (row-vector times the block-diagonal 2x2 rotation
    matrix) exactly, including the reference's (i - 1) exponent quirk.
    """
    d = embedding_dim
    i = np.arange(d // 2, dtype=np.float64)
    theta = 10000.0 ** (-2.0 * (i - 1.0) / d)                       # (d/2,)
    ang = np.arange(context_window, dtype=np.float64)[:, None] * theta[None, :]
    cos = np.concatenate([np.cos(ang), np.cos(ang)], axis=1)        # (M, d)
    sin = np.concatenate([np.sin(ang), -np.sin(ang)], axis=1)       # (M, d)
    return cos.astype(np.float32), sin.astype(np.float32)


# ----------------------------------------------------------------------------
# Pallas kernel wrapper
# ----------------------------------------------------------------------------
def rope_attention_head(x, wq, wk, wv):
    """x: (B, M, D) float32; wq/wk/wv: torch-style (out, in) Linear weights."""
    B, M, D = x.shape
    assert D % 2 == 0
    half = D // 2
    BM = B * M
    scale = 1.0 / np.sqrt(D)

    # Rotate-half column permutation: even pair-columns first, then odd.
    # Scores are invariant to a consistent permutation of the q/k feature axis.
    perm = np.concatenate([np.arange(0, D, 2), np.arange(1, D, 2)])

    # Offline weight prep: transpose, permute q/k output columns, fold the
    # 1/sqrt(d) attention scale into the q projection, fuse into one matrix.
    wq_t = (wq.T * scale)[:, perm]
    wk_t = wk.T[:, perm]
    wv_t = wv.T                                   # v keeps the original layout
    w_fused = jnp.concatenate([wq_t, wk_t, wv_t], axis=1).astype(jnp.float32)  # (D, 3D)

    # Rotation tables passed once (M, D); broadcast over batch inside the kernel.
    cos_np, sin_np = rope_half_tables(M, D)
    cos_tab = jnp.asarray(cos_np)
    sin_tab = jnp.asarray(sin_np)

    # Block-diagonal additive bias so the whole batch runs as ONE attention:
    # row r = b*M + p only attends to columns in the same batch b.
    blk = np.repeat(np.arange(B), M)
    bias_np = np.where(blk[:, None] == blk[None, :], 0.0, -1e30).astype(np.float32)
    bias = jnp.asarray(bias_np)                                     # (BM, BM)

    x_flat = x.reshape(BM, D).astype(jnp.float32)

    def kernel(x_ref, w_ref, cos_ref, sin_ref, bias_ref, o_ref):
        xv = x_ref[...]                                             # (BM, D) f32
        # Single fused projection for q|k|v (one wide MXU matmul).
        qkv = jnp.dot(xv, w_ref[...], preferred_element_type=jnp.float32)  # (BM, 3D)
        q = qkv[:, 0:D]              # pre-scaled, permuted; lane-aligned at D=128
        k = qkv[:, D:2 * D]          # permuted
        v = qkv[:, 2 * D:3 * D]      # original layout

        # Broadcast the (M, D) tables over batch (sublane concat, tiny).
        cos = jnp.concatenate([cos_ref[...]] * B, axis=0)           # (BM, D)
        sin = jnp.concatenate([sin_ref[...]] * B, axis=0)

        def rotate(t):
            # rotate-half partner: lane j pairs with lane (j + D/2) mod D.
            # One XLU lane rotation (free slot) instead of slice+slice+concat.
            partner = pltpu.roll(t, shift=half, axis=1)
            return t * cos + partner * sin                          # f32 elementwise

        q_rot = rotate(q)
        k_rot = rotate(k)

        # One fused score matmul for all batches; block-diagonal bias keeps
        # cross-batch entries at -1e30 (-> exp == 0).  Contract the feature
        # dims directly (no materialized k^T); 1/sqrt(d) is folded into Wq.
        s = lax.dot_general(q_rot, k_rot,
                            dimension_numbers=(((1,), (1,)), ((), ())),
                            preferred_element_type=jnp.float32)     # (BM, BM)
        s = s + bias_ref[...]
        s = s - jnp.max(s, axis=-1, keepdims=True)
        p = jnp.exp(s)
        denom = jnp.sum(p, axis=-1, keepdims=True)                  # (BM, 1)
        o_un = jnp.dot(p, v, preferred_element_type=jnp.float32)    # (BM, D)
        # Deferred normalization: O(BM*D) scale with EUP reciprocal.
        o_ref[...] = (o_un * pl.reciprocal(denom, approx=True)).astype(o_ref.dtype)
        # TODO(synk): F.scaled_dot_product_attention(dropout_p=0.1) applies
        # stochastic dropout tied to torch's RNG; omitted here (eval semantics).

    out_flat = pl.pallas_call(
        kernel,
        out_shape=jax.ShapeDtypeStruct((BM, D), jnp.float32),
        # Grid-less call: whole arrays live in VMEM, no pipeline machinery.
        in_specs=[pl.BlockSpec(memory_space=pltpu.MemorySpace.VMEM)] * 5,
        out_specs=pl.BlockSpec(memory_space=pltpu.MemorySpace.VMEM),
    )(x_flat, w_fused, cos_tab, sin_tab, bias)

    return out_flat.reshape(B, M, D)


# ----------------------------------------------------------------------------
# Plain-JAX reference (dense R bmm, no dropout) for a sanity check
# ----------------------------------------------------------------------------
def reference(x, wq, wk, wv, R):
    q = x @ wq.T
    k = x @ wk.T
    v = x @ wv.T
    q_rot = jnp.einsum("bpd,pde->bpe", q, R)
    k_rot = jnp.einsum("bpd,pde->bpe", k, R)
    d = x.shape[-1]
    scores = jnp.einsum("bqd,bkd->bqk", q_rot, k_rot) / jnp.sqrt(jnp.float32(d))
    p = jax.nn.softmax(scores, axis=-1)
    return jnp.einsum("bqk,bkd->bqd", p, v)


if __name__ == "__main__":
    # Small shapes consistent with the module: seq = context_window = 16,
    # d_model scaled down 512 -> 128 (keeps q/k/v slices lane-aligned and the
    # output store lane-dense on TPU).
    B, M, D = 2, 16, 128

    key = jax.random.PRNGKey(0)
    kx, kq, kk, kv = jax.random.split(key, 4)
    x = jax.random.normal(kx, (B, M, D), dtype=jnp.float32)
    bound = 1.0 / np.sqrt(D)  # nn.Linear default uniform init range
    wq = jax.random.uniform(kq, (D, D), jnp.float32, -bound, bound)
    wk = jax.random.uniform(kk, (D, D), jnp.float32, -bound, bound)
    wv = jax.random.uniform(kv, (D, D), jnp.float32, -bound, bound)

    out = rope_attention_head(x, wq, wk, wv)
    out = jax.block_until_ready(out)

    R = jnp.asarray(get_rotary_matrix_np(M, D))
    with jax.default_matmul_precision("highest"):
        ref = reference(x, wq, wk, wv, R)
    ref = jax.block_until_ready(ref)
    np.testing.assert_allclose(np.asarray(out), np.asarray(ref), rtol=2e-2, atol=2e-2)

    print("KERNEL_OK")
</pallas_src>

<mosaic_0001>
module attributes {stable_mosaic.version = 11 : i64} {
  func.func @kernel(%arg0: memref<32x128xf32, #tpu.memory_space<vmem>>, %arg1: memref<128x384xf32, #tpu.memory_space<vmem>>, %arg2: memref<16x128xf32, #tpu.memory_space<vmem>>, %arg3: memref<16x128xf32, #tpu.memory_space<vmem>>, %arg4: memref<32x32xf32, #tpu.memory_space<vmem>>, %arg5: memref<32x128xf32, #tpu.memory_space<vmem>>) attributes {dimension_semantics = [], scalar_prefetch = 0 : i64, scratch_operands = 0 : i64, tpu.core_type = #tpu.core_type<tc>} {
    %c0 = arith.constant 0 : index
    %c0_0 = arith.constant 0 : index
    %0 = vector.load %arg0[%c0, %c0_0] : memref<32x128xf32, #tpu.memory_space<vmem>>, vector<32x128xf32>
    %c0_1 = arith.constant 0 : index
    %c0_2 = arith.constant 0 : index
    %1 = vector.load %arg1[%c0_1, %c0_2] : memref<128x384xf32, #tpu.memory_space<vmem>>, vector<128x384xf32>
    %cst = arith.constant dense<0.000000e+00> : vector<32x384xf32>
    %2 = tpu.matmul %0, %1, %cst {dimension_numbers = #tpu.dot_dimension_numbers<[1], [0], [0], [1], [0, 0, 1, 1], [], []>} : vector<32x128xf32>, vector<128x384xf32>, vector<32x384xf32> -> vector<32x384xf32>
    %3 = vector.extract_strided_slice %2 {offsets = [0, 0], sizes = [32, 128], strides = [1, 1]} : vector<32x384xf32> to vector<32x128xf32>
    %4 = vector.extract_strided_slice %2 {offsets = [0, 128], sizes = [32, 128], strides = [1, 1]} : vector<32x384xf32> to vector<32x128xf32>
    %5 = vector.extract_strided_slice %2 {offsets = [0, 256], sizes = [32, 128], strides = [1, 1]} : vector<32x384xf32> to vector<32x128xf32>
    %c0_3 = arith.constant 0 : index
    %c0_4 = arith.constant 0 : index
    %6 = vector.load %arg2[%c0_3, %c0_4] : memref<16x128xf32, #tpu.memory_space<vmem>>, vector<16x128xf32>
    %7 = tpu.concatenate %6, %6 in 0 : vector<16x128xf32>, vector<16x128xf32> -> vector<32x128xf32>
    %c0_5 = arith.constant 0 : index
    %c0_6 = arith.constant 0 : index
    %8 = vector.load %arg3[%c0_5, %c0_6] : memref<16x128xf32, #tpu.memory_space<vmem>>, vector<16x128xf32>
    %9 = tpu.concatenate %8, %8 in 0 : vector<16x128xf32>, vector<16x128xf32> -> vector<32x128xf32>
    %c64_i32 = arith.constant 64 : i32
    %10 = tpu.dynamic_rotate %3 by %c64_i32 dim 1 : vector<32x128xf32>, i32 -> vector<32x128xf32>
    %11 = arith.mulf %3, %7 : vector<32x128xf32>
    %12 = arith.mulf %10, %9 : vector<32x128xf32>
    %13 = arith.addf %11, %12 : vector<32x128xf32>
    %c64_i32_7 = arith.constant 64 : i32
    %14 = tpu.dynamic_rotate %4 by %c64_i32_7 dim 1 : vector<32x128xf32>, i32 -> vector<32x128xf32>
    %15 = arith.mulf %4, %7 : vector<32x128xf32>
    %16 = arith.mulf %14, %9 : vector<32x128xf32>
    %17 = arith.addf %15, %16 : vector<32x128xf32>
    %cst_8 = arith.constant dense<0.000000e+00> : vector<32x32xf32>
    %18 = tpu.matmul %13, %17, %cst_8 {dimension_numbers = #tpu.dot_dimension_numbers<[1], [1], [0], [0], [0, 0, 1, 0], [], []>} : vector<32x128xf32>, vector<32x128xf32>, vector<32x32xf32> -> vector<32x32xf32>
    %c0_9 = arith.constant 0 : index
    %c0_10 = arith.constant 0 : index
    %19 = vector.load %arg4[%c0_9, %c0_10] : memref<32x32xf32, #tpu.memory_space<vmem>>, vector<32x32xf32>
    %20 = arith.addf %18, %19 : vector<32x32xf32>
    %cst_11 = arith.constant dense<0xFF800000> : vector<32xf32>
    %21 = vector.multi_reduction <maximumf>, %20, %cst_11 [1] : vector<32x32xf32> to vector<32xf32>
    %22 = vector.shape_cast %21 : vector<32xf32> to vector<32x1xf32>
    %23 = vector.broadcast %22 : vector<32x1xf32> to vector<32x32xf32>
    %24 = arith.subf %20, %23 : vector<32x32xf32>
    %25 = math.exp %24 : vector<32x32xf32>
    %cst_12 = arith.constant dense<0.000000e+00> : vector<32xf32>
    %26 = vector.multi_reduction <add>, %25, %cst_12 [1] : vector<32x32xf32> to vector<32xf32>
    %27 = vector.shape_cast %26 : vector<32xf32> to vector<32x1xf32>
    %cst_13 = arith.constant dense<0.000000e+00> : vector<32x128xf32>
    %28 = tpu.matmul %25, %5, %cst_13 {dimension_numbers = #tpu.dot_dimension_numbers<[1], [0], [0], [1], [0, 0, 1, 1], [], []>} : vector<32x32xf32>, vector<32x128xf32>, vector<32x128xf32> -> vector<32x128xf32>
    %29 = tpu.reciprocal %27 {approx = true} : vector<32x1xf32> -> vector<32x1xf32>
    %30 = vector.broadcast %29 : vector<32x1xf32> to vector<32x128xf32>
    %31 = arith.mulf %28, %30 : vector<32x128xf32>
    %c0_14 = arith.constant 0 : index
    %c0_15 = arith.constant 0 : index
    %32 = vector.load %arg5[%c0_14, %c0_15] : memref<32x128xf32, #tpu.memory_space<vmem>>, vector<32x128xf32>
    tpu.vector_store %arg5[%c0_14, %c0_15], %31 {strides = array<i32>} : memref<32x128xf32, #tpu.memory_space<vmem>>, vector<32x128xf32>,
    return
  }
}

</mosaic_0001>

<llo_original>
// kernel: tpu_custom_call.1
$region0: #{tpu_custom_call.1}
  #allocation0 [shape = 'u32[]', space=smem, size = 0x4, offset = 0x4, fixed_abs, tag = 'smem constant byte address 0x4 - core index']
  #allocation1 [shape = 'u32[72,128]{1,0:T(1,128)}', space=vmem, size = 0x9000, scoped, tag = 'internal scratch']
  %s0 = inlined_call_operand.hbm [shape: f32[32,128], index: 0, kind: input, shape index: {}]
  %s1 = inlined_call_operand.hbm [shape: f32[128,384], index: 1, kind: input, shape index: {}]
  %s2 = inlined_call_operand.hbm [shape: f32[16,128], index: 2, kind: input, shape index: {}]
  %s3 = inlined_call_operand.hbm [shape: f32[16,128], index: 3, kind: input, shape index: {}]
  %s4 = inlined_call_operand.hbm [shape: f32[32,32], index: 4, kind: input, shape index: {}]
  %s5 = inlined_call_operand.hbm [shape: f32[32,128], index: 5, kind: output, shape index: {}]
  %s6 = sld [smem:[#allocation0]]
  $region50: #{tpu_custom_call.1} parent=0
    _
  %s8 = ssub.s32 1, %s6
  %s9 = scalar_select 0, %s8, %s6
  $region1: #{tpu_custom_call.1} parent=0
    #allocation2 [shape = 'u8[16384]{0}', space=vmem, size = 0x4000, scoped, tag = 'input window, operand 0, single buffered']
    #allocation3 [shape = 's32[1]{0}', space=sflag, size = 0x4, scoped, tag = 'scoped memory for tpu_custom_call.1']
    #allocation4 [shape = 's32[1]{0}', space=sflag, size = 0x4, scoped, tag = 'scoped memory for tpu_custom_call.1']
    #allocation5 [shape = 'u8[196608]{0}', space=vmem, size = 0x30000, scoped, tag = 'input window, operand 1, single buffered']
    #allocation6 [shape = 's32[1]{0}', space=sflag, size = 0x4, scoped, tag = 'scoped memory for tpu_custom_call.1']
    #allocation7 [shape = 'u8[8192]{0}', space=vmem, size = 0x2000, scoped, tag = 'input window, operand 2, single buffered']
    #allocation8 [shape = 'u8[8192]{0}', space=vmem, size = 0x2000, scoped, tag = 'input window, operand 3, single buffered']
    #allocation9 [shape = 's32[1]{0}', space=sflag, size = 0x4, scoped, tag = 'scoped memory for tpu_custom_call.1']
    #allocation10 [shape = 'u8[16384]{0}', space=vmem, size = 0x4000, scoped, tag = 'input window, operand 4, single buffered']
    #allocation11 [shape = 'u8[16384]{0}', space=vmem, size = 0x4000, scoped, tag = 'output window, operand 0, single buffered']
    %10 = vsyncpa [#allocation3], 0
    %11 = vsyncpa [#allocation6], 0
    %12 = vsyncpa [#allocation9], 0
    %13 = vsyncpa [#allocation4], 0
    // Predicated region
    $region2: #{tpu_custom_call.1} parent=1 // pred_check
      _
    $region3: #{tpu_custom_call.1} parent=1 // pred_check_branch
      %15 = sbr.rel (0) target = $region5
    $region4: #{tpu_custom_call.1} parent=1 // pred_region
      %17 = vsyncadd [#allocation3], 0
      %s18 = sshll.u32 %s0, 4
      %s19 = int_to_ptr.hbm [resolvable:$true] %s18
      %s20 = sshll.u32 [#allocation2], 4
      %s21 = int_to_ptr.vmem [resolvable:$true] %s20
      %26 = dma.hbm_to_vmem [thread:$0]  %s19, 512, %s21, [#allocation3], 128, 128, 8
    $region5: #{tpu_custom_call.1} parent=1 // pred_fallthru
      _
    // Predicated region
    $region6: #{tpu_custom_call.1} parent=1 // pred_check
      _
    $region7: #{tpu_custom_call.1} parent=1 // pred_check_branch
      %28 = sbr.rel (0) target = $region9
    $region8: #{tpu_custom_call.1} parent=1 // pred_region
      %30 = vsyncadd [#allocation6], 0
      %s31 = sshll.u32 %s1, 4
      %s32 = int_to_ptr.hbm [resolvable:$true] %s31
      %s33 = sshll.u32 [#allocation5], 4
      %s34 = int_to_ptr.vmem [resolvable:$true] %s33
      %39 = dma.hbm_to_vmem [thread:$0]  %s32, 6144, %s34, [#allocation6], 384, 384, 24
    $region9: #{tpu_custom_call.1} parent=1 // pred_fallthru
      _
    // Predicated region
    $region10: #{tpu_custom_call.1} parent=1 // pred_check
      _
    $region11: #{tpu_custom_call.1} parent=1 // pred_check_branch
      %41 = sbr.rel (0) target = $region13
    $region12: #{tpu_custom_call.1} parent=1 // pred_region
      %43 = vsyncadd [#allocation6], 0
      %s44 = sshll.u32 %s2, 4
      %s45 = int_to_ptr.hbm [resolvable:$true] %s44
      %s46 = sshll.u32 [#allocation7], 4
      %s47 = int_to_ptr.vmem [resolvable:$true] %s46
      %52 = dma.hbm_to_vmem [thread:$0]  %s45, 256, %s47, [#allocation6], 128, 128, 8
    $region13: #{tpu_custom_call.1} parent=1 // pred_fallthru
      _
    // Predicated region
    $region14: #{tpu_custom_call.1} parent=1 // pred_check
      _
    $region15: #{tpu_custom_call.1} parent=1 // pred_check_branch
      %54 = sbr.rel (0) target = $region17
    $region16: #{tpu_custom_call.1} parent=1 // pred_region
      %56 = vsyncadd [#allocation9], 0
      %s57 = sshll.u32 %s3, 4
      %s58 = int_to_ptr.hbm [resolvable:$true] %s57
      %s59 = sshll.u32 [#allocation8], 4
      %s60 = int_to_ptr.vmem [resolvable:$true] %s59
      %65 = dma.hbm_to_vmem [thread:$0]  %s58, 256, %s60, [#allocation9], 128, 128, 8
    $region17: #{tpu_custom_call.1} parent=1 // pred_fallthru
      _
    // Predicated region
    $region18: #{tpu_custom_call.1} parent=1 // pred_check
      _
    $region19: #{tpu_custom_call.1} parent=1 // pred_check_branch
      %67 = sbr.rel (0) target = $region21
    $region20: #{tpu_custom_call.1} parent=1 // pred_region
      %69 = vsyncadd [#allocation9], 0
      %s70 = sshll.u32 %s4, 4
      %s71 = int_to_ptr.hbm [resolvable:$true] %s70
      %s72 = sshll.u32 [#allocation10], 4
      %s73 = int_to_ptr.vmem [resolvable:$true] %s72
      %78 = dma.hbm_to_vmem [thread:$0]  %s71, 512, %s73, [#allocation9], 128, 128, 8
    $region21: #{tpu_custom_call.1} parent=1 // pred_fallthru
      _
    // Predicated region
    $region22: #{tpu_custom_call.1} parent=1 // pred_check
      _
    $region23: #{tpu_custom_call.1} parent=1 // pred_check_branch
      %80 = sbr.rel (0) target = $region25
    $region24: #{tpu_custom_call.1} parent=1 // pred_region
      %82 = dma.done [#allocation3], 512
    $region25: #{tpu_custom_call.1} parent=1 // pred_fallthru
      _
    // Predicated region
    $region26: #{tpu_custom_call.1} parent=1 // pred_check
      _
    $region27: #{tpu_custom_call.1} parent=1 // pred_check_branch
      %84 = sbr.rel (0) target = $region29
    $region28: #{tpu_custom_call.1} parent=1 // pred_region
      %86 = dma.done [#allocation6], 6144
    $region29: #{tpu_custom_call.1} parent=1 // pred_fallthru
      _
    // Predicated region
    $region30: #{tpu_custom_call.1} parent=1 // pred_check
      _
    $region31: #{tpu_custom_call.1} parent=1 // pred_check_branch
      %88 = sbr.rel (0) target = $region33
    $region32: #{tpu_custom_call.1} parent=1 // pred_region
      %90 = dma.done [#allocation6], 256
    $region33: #{tpu_custom_call.1} parent=1 // pred_fallthru
      _
    // Predicated region
    $region34: #{tpu_custom_call.1} parent=1 // pred_check
      _
    $region35: #{tpu_custom_call.1} parent=1 // pred_check_branch
      %92 = sbr.rel (0) target = $region37
    $region36: #{tpu_custom_call.1} parent=1 // pred_region
      %94 = dma.done [#allocation9], 256
    $region37: #{tpu_custom_call.1} parent=1 // pred_fallthru
      _
    // Predicated region
    $region38: #{tpu_custom_call.1} parent=1 // pred_check
      _
    $region39: #{tpu_custom_call.1} parent=1 // pred_check_branch
      %96 = sbr.rel (0) target = $region41
    $region40: #{tpu_custom_call.1} parent=1 // pred_region
      %98 = dma.done [#allocation9], 512
    $region41: #{tpu_custom_call.1} parent=1 // pred_fallthru
      _
    %v99 = vld [vmem:[#allocation2] sm:$0xff]
    %v100 = vld [vmem:[#allocation2 + $0x8] sm:$0xff]
    %v101 = vld [vmem:[#allocation2 + $0x10] sm:$0xff]
    %v102 = vld [vmem:[#allocation2 + $0x18] sm:$0xff]
    %v103 = vld [vmem:[#allocation5] sm:$0xff]
    %v104 = vld [vmem:[#allocation5 + $0x8] sm:$0xff]
    %v105 = vld [vmem:[#allocation5 + $0x10] sm:$0xff]
    %v106 = vld [vmem:[#allocation5 + $0x18] sm:$0xff]
    %v107 = vld [vmem:[#allocation5 + $0x20] sm:$0xff]
    %v108 = vld [vmem:[#allocation5 + $0x28] sm:$0xff]
    %v109 = vld [vmem:[#allocation5 + $0x30] sm:$0xff]
    %v110 = vld [vmem:[#allocation5 + $0x38] sm:$0xff]
    %v111 = vld [vmem:[#allocation5 + $0x40] sm:$0xff]
    %v112 = vld [vmem:[#allocation5 + $0x48] sm:$0xff]
    %v113 = vld [vmem:[#allocation5 + $0x50] sm:$0xff]
    %v114 = vld [vmem:[#allocation5 + $0x58] sm:$0xff]
    %v115 = vld [vmem:[#allocation5 + $0x60] sm:$0xff]
    %v116 = vld [vmem:[#allocation5 + $0x68] sm:$0xff]
    %v117 = vld [vmem:[#allocation5 + $0x70] sm:$0xff]
    %v118 = vld [vmem:[#allocation5 + $0x78] sm:$0xff]
    %v119 = vld [vmem:[#allocation5 + $0x80] sm:$0xff]
    %v120 = vld [vmem:[#allocation5 + $0x88] sm:$0xff]
    %v121 = vld [vmem:[#allocation5 + $0x90] sm:$0xff]
    %v122 = vld [vmem:[#allocation5 + $0x98] sm:$0xff]
    %v123 = vld [vmem:[#allocation5 + $0xa0] sm:$0xff]
    %v124 = vld [vmem:[#allocation5 + $0xa8] sm:$0xff]
    %v125 = vld [vmem:[#allocation5 + $0xb0] sm:$0xff]
    %v126 = vld [vmem:[#allocation5 + $0xb8] sm:$0xff]
    %v127 = vld [vmem:[#allocation5 + $0xc0] sm:$0xff]
    %v128 = vld [vmem:[#allocation5 + $0xc8] sm:$0xff]
    %v129 = vld [vmem:[#allocation5 + $0xd0] sm:$0xff]
    %v130 = vld [vmem:[#allocation5 + $0xd8] sm:$0xff]
    %v131 = vld [vmem:[#allocation5 + $0xe0] sm:$0xff]
    %v132 = vld [vmem:[#allocation5 + $0xe8] sm:$0xff]
    %v133 = vld [vmem:[#allocation5 + $0xf0] sm:$0xff]
    %v134 = vld [vmem:[#allocation5 + $0xf8] sm:$0xff]
    %v135 = vld [vmem:[#allocation5 + $0x100] sm:$0xff]
    %v136 = vld [vmem:[#allocation5 + $0x108] sm:$0xff]
    %v137 = vld [vmem:[#allocation5 + $0x110] sm:$0xff]
    %v138 = vld [vmem:[#allocation5 + $0x118] sm:$0xff]
    %v139 = vld [vmem:[#allocation5 + $0x120] sm:$0xff]
    %v140 = vld [vmem:[#allocation5 + $0x128] sm:$0xff]
    %v141 = vld [vmem:[#allocation5 + $0x130] sm:$0xff]
    %v142 = vld [vmem:[#allocation5 + $0x138] sm:$0xff]
    %v143 = vld [vmem:[#allocation5 + $0x140] sm:$0xff]
    %v144 = vld [vmem:[#allocation5 + $0x148] sm:$0xff]
    %v145 = vld [vmem:[#allocation5 + $0x150] sm:$0xff]
    %v146 = vld [vmem:[#allocation5 + $0x158] sm:$0xff]
    %v147 = vld [vmem:[#allocation5 + $0x160] sm:$0xff]
    %v148 = vld [vmem:[#allocation5 + $0x168] sm:$0xff]
    %v149 = vld [vmem:[#allocation5 + $0x170] sm:$0xff]
    %v150 = vld [vmem:[#allocation5 + $0x178] sm:$0xff]
    %151 = vmatpush.msra.mxu0 %v148
    %152 = vmatpush.msra.mxu0 %v145
    %153 = vmatpush.msra.mxu0 %v142
    %154 = vmatpush.msra.mxu0 %v139
    %155 = vmatpush.msra.mxu0 %v136
    %156 = vmatpush.msra.mxu0 %v133
    %157 = vmatpush.msra.mxu0 %v130
    %158 = vmatpush.msra.mxu0 %v127
    %159 = vmatpush.msra.mxu0 %v124
    %160 = vmatpush.msra.mxu0 %v121
    %161 = vmatpush.msra.mxu0 %v118
    %162 = vmatpush.msra.mxu0 %v115
    %163 = vmatpush.msra.mxu0 %v112
    %164 = vmatpush.msra.mxu0 %v109
    %165 = vmatpush.msra.mxu0 %v106
    %166 = vmatpush.msra.mxu0 %v103
    %167 = vmatmul.f32.gmra.mxu0 %v99
    %v168 = vpop.f32.mrf.mxu0
    %v169 = vadd.f32 0.0, %v168
    %170 = vmatmul.f32.gmra.mxu0 %v100
    %v171 = vpop.f32.mrf.mxu0
    %v172 = vadd.f32 0.0, %v171
    %173 = vmatmul.f32.gmra.mxu0 %v101
    %v174 = vpop.f32.mrf.mxu0
    %v175 = vadd.f32 0.0, %v174
    %176 = vmatmul.f32.gmra.mxu0 %v102
    %v177 = vpop.f32.mrf.mxu0
    %v178 = vadd.f32 0.0, %v177
    %179 = vdwg.mxu0
    %180 = vmatpush.msra.mxu0 %v149
    %181 = vmatpush.msra.mxu0 %v146
    %182 = vmatpush.msra.mxu0 %v143
    %183 = vmatpush.msra.mxu0 %v140
    %184 = vmatpush.msra.mxu0 %v137
    %185 = vmatpush.msra.mxu0 %v134
    %186 = vmatpush.msra.mxu0 %v131
    %187 = vmatpush.msra.mxu0 %v128
    %188 = vmatpush.msra.mxu0 %v125
    %189 = vmatpush.msra.mxu0 %v122
    %190 = vmatpush.msra.mxu0 %v119
    %191 = vmatpush.msra.mxu0 %v116
    %192 = vmatpush.msra.mxu0 %v113
    %193 = vmatpush.msra.mxu0 %v110
    %194 = vmatpush.msra.mxu0 %v107
    %195 = vmatpush.msra.mxu0 %v104
    %196 = vmatmul.f32.gmra.mxu0 %v99
    %v197 = vpop.f32.mrf.mxu0
    %v198 = vadd.f32 0.0, %v197
    %199 = vmatmul.f32.gmra.mxu0 %v100
    %v200 = vpop.f32.mrf.mxu0
    %v201 = vadd.f32 0.0, %v200
    %202 = vmatmul.f32.gmra.mxu0 %v101
    %v203 = vpop.f32.mrf.mxu0
    %v204 = vadd.f32 0.0, %v203
    %205 = vmatmul.f32.gmra.mxu0 %v102
    %v206 = vpop.f32.mrf.mxu0
    %v207 = vadd.f32 0.0, %v206
    %208 = vdwg.mxu0
    %209 = vmatpush.msra.mxu0 %v150
    %210 = vmatpush.msra.mxu0 %v147
    %211 = vmatpush.msra.mxu0 %v144
    %212 = vmatpush.msra.mxu0 %v141
    %213 = vmatpush.msra.mxu0 %v138
    %214 = vmatpush.msra.mxu0 %v135
    %215 = vmatpush.msra.mxu0 %v132
    %216 = vmatpush.msra.mxu0 %v129
    %217 = vmatpush.msra.mxu0 %v126
    %218 = vmatpush.msra.mxu0 %v123
    %219 = vmatpush.msra.mxu0 %v120
    %220 = vmatpush.msra.mxu0 %v117
    %221 = vmatpush.msra.mxu0 %v114
    %222 = vmatpush.msra.mxu0 %v111
    %223 = vmatpush.msra.mxu0 %v108
    %224 = vmatpush.msra.mxu0 %v105
    %225 = vmatmul.f32.gmra.mxu0 %v99
    %v226 = vpop.f32.mrf.mxu0
    %v227 = vadd.f32 0.0, %v226
    %228 = vmatmul.f32.gmra.mxu0 %v100
    %v229 = vpop.f32.mrf.mxu0
    %v230 = vadd.f32 0.0, %v229
    %231 = vmatmul.f32.gmra.mxu0 %v101
    %v232 = vpop.f32.mrf.mxu0
    %v233 = vadd.f32 0.0, %v232
    %234 = vmatmul.f32.gmra.mxu0 %v102
    %v235 = vpop.f32.mrf.mxu0
    %v236 = vadd.f32 0.0, %v235
    %237 = vdwg.mxu0
    %v238 = vld [vmem:[#allocation7] sm:$0xff]
    %v239 = vld [vmem:[#allocation7 + $0x8] sm:$0xff]
    %v240 = vld [vmem:[#allocation8] sm:$0xff]
    %v241 = vld [vmem:[#allocation8 + $0x8] sm:$0xff]
    %242 = vrot.lane.b32.xlu0 %v169, 64
    %v243 = vpop.permute.xlu0 %242
    %244 = vrot.lane.b32.xlu0 %v172, 64
    %v245 = vpop.permute.xlu0 %244
    %246 = vrot.lane.b32.xlu0 %v175, 64
    %v247 = vpop.permute.xlu0 %246
    %248 = vrot.lane.b32.xlu0 %v178, 64
    %v249 = vpop.permute.xlu0 %248
    %v250 = vmul.f32 %v169, %v238
    %v251 = vmul.f32 %v172, %v239
    %v252 = vmul.f32 %v175, %v238
    %v253 = vmul.f32 %v178, %v239
    %v254 = vmul.f32 %v243, %v240
    %v255 = vmul.f32 %v245, %v241
    %v256 = vmul.f32 %v247, %v240
    %v257 = vmul.f32 %v249, %v241
    %v258 = vadd.f32 %v250, %v254
    %v259 = vadd.f32 %v251, %v255
    %v260 = vadd.f32 %v252, %v256
    %v261 = vadd.f32 %v253, %v257
    %262 = vrot.lane.b32.xlu0 %v198, 64
    %v263 = vpop.permute.xlu0 %262
    %264 = vrot.lane.b32.xlu0 %v201, 64
    %v265 = vpop.permute.xlu0 %264
    %266 = vrot.lane.b32.xlu0 %v204, 64
    %v267 = vpop.permute.xlu0 %266
    %268 = vrot.lane.b32.xlu0 %v207, 64
    %v269 = vpop.permute.xlu0 %268
    %v270 = vmul.f32 %v198, %v238
    %v271 = vmul.f32 %v201, %v239
    %v272 = vmul.f32 %v204, %v238
    %v273 = vmul.f32 %v207, %v239
    %v274 = vmul.f32 %v263, %v240
    %v275 = vmul.f32 %v265, %v241
    %v276 = vmul.f32 %v267, %v240
    %v277 = vmul.f32 %v269, %v241
    %v278 = vadd.f32 %v270, %v274
    %v279 = vadd.f32 %v271, %v275
    %v280 = vadd.f32 %v272, %v276
    %v281 = vadd.f32 %v273, %v277
    %v282 = vld [vmem:[#allocation10] sm:$0xff]
    %v283 = vld [vmem:[#allocation10 + $0x8] sm:$0xff]
    %v284 = vld [vmem:[#allocation10 + $0x10] sm:$0xff]
    %v285 = vld [vmem:[#allocation10 + $0x18] sm:$0xff]
    %286 = vmatpush.xpose.msra.mxu0 0.0
    %287 = vmatpush.xpose.msra.mxu0 0.0
    %288 = vmatpush.xpose.msra.mxu0 0.0
    %289 = vmatpush.xpose.msra.mxu0 0.0
    %290 = vmatpush.xpose.msra.mxu0 0.0
    %291 = vmatpush.xpose.msra.mxu0 0.0
    %292 = vmatpush.xpose.msra.mxu0 0.0
    %293 = vmatpush.xpose.msra.mxu0 0.0
    %294 = vmatpush.xpose.msra.mxu0 0.0
    %295 = vmatpush.xpose.msra.mxu0 0.0
    %296 = vmatpush.xpose.msra.mxu0 0.0
    %297 = vmatpush.xpose.msra.mxu0 0.0
    %298 = vmatpush.xpose.msra.mxu0 %v281
    %299 = vmatpush.xpose.msra.mxu0 %v280
    %300 = vmatpush.xpose.msra.mxu0 %v279
    %301 = vmatpush.xpose.msra.mxu0 %v278
    %302 = vmatmul.f32.gmra.mxu0 %v258
    %v303 = vpop.f32.mrf.mxu0
    %v304 = vadd.f32 %v282, %v303
    %305 = vmatmul.f32.gmra.mxu0 %v259
    %v306 = vpop.f32.mrf.mxu0
    %v307 = vadd.f32 %v283, %v306
    %308 = vmatmul.f32.gmra.mxu0 %v260
    %v309 = vpop.f32.mrf.mxu0
    %v310 = vadd.f32 %v284, %v309
    %311 = vmatmul.f32.gmra.mxu0 %v261
    %v312 = vpop.f32.mrf.mxu0
    %v313 = vadd.f32 %v285, %v312
    %314 = vdwg.mxu0
    %vm315 = vcmask 261120
    %v316 = vsel %vm315, %v304, -inf
    %317 = vmax.xlane.f32.xlu0 %v316
    %v318 = vpop.xlane.xlu0 %317
    %v319 = vsel %vm315, %v307, -inf
    %320 = vmax.xlane.f32.xlu0 %v319
    %v321 = vpop.xlane.xlu0 %320
    %v322 = vsel %vm315, %v310, -inf
    %323 = vmax.xlane.f32.xlu0 %v322
    %v324 = vpop.xlane.xlu0 %323
    %v325 = vsel %vm315, %v313, -inf
    %326 = vmax.xlane.f32.xlu0 %v325
    %v327 = vpop.xlane.xlu0 %326
    %v328 = vsub.f32 %v304, %v318
    %v329 = vsub.f32 %v307, %v321
    %v330 = vsub.f32 %v310, %v324
    %v331 = vsub.f32 %v313, %v327
    %v332 = vmul.f32 %v328, 1.442695
    %v333 = vpow.pop %v332
    %v334 = vmul.f32 %v329, 1.442695
    %v335 = vpow.pop %v334
    %v336 = vmul.f32 %v330, 1.442695
    %v337 = vpow.pop %v336
    %v338 = vmul.f32 %v331, 1.442695
    %v339 = vpow.pop %v338
    %v340 = vsel %vm315, %v333, 0.0
    %341 = vadd.xlane.f32.xlu0 %v340
    %v342 = vpop.xlane.xlu0 %341
    %v343 = vsel %vm315, %v335, 0.0
    %344 = vadd.xlane.f32.xlu0 %v343
    %v345 = vpop.xlane.xlu0 %344
    %v346 = vsel %vm315, %v337, 0.0
    %347 = vadd.xlane.f32.xlu0 %v346
    %v348 = vpop.xlane.xlu0 %347
    %v349 = vsel %vm315, %v339, 0.0
    %350 = vadd.xlane.f32.xlu0 %v349
    %v351 = vpop.xlane.xlu0 %350
    %v353 = vsel %vm315, %v333, 0
    %v356 = vsel %vm315, %v335, 0
    %v359 = vsel %vm315, %v337, 0
    %v362 = vsel %vm315, %v339, 0
    %364 = vmatpush.msra.mxu0 0.0
    %365 = vmatpush.msra.mxu0 0.0
    %366 = vmatpush.msra.mxu0 0.0
    %367 = vmatpush.msra.mxu0 0.0
    %368 = vmatpush.msra.mxu0 0.0
    %369 = vmatpush.msra.mxu0 0.0
    %370 = vmatpush.msra.mxu0 0.0
    %371 = vmatpush.msra.mxu0 0.0
    %372 = vmatpush.msra.mxu0 0.0
    %373 = vmatpush.msra.mxu0 0.0
    %374 = vmatpush.msra.mxu0 0.0
    %375 = vmatpush.msra.mxu0 0.0
    %376 = vmatpush.msra.mxu0 %v236
    %377 = vmatpush.msra.mxu0 %v233
    %378 = vmatpush.msra.mxu0 %v230
    %379 = vmatpush.msra.mxu0 %v227
    %380 = vmatmul.f32.gmra.mxu0 %v353
    %v381 = vpop.f32.mrf.mxu0
    %v382 = vadd.f32 0.0, %v381
    %383 = vmatmul.f32.gmra.mxu0 %v356
    %v384 = vpop.f32.mrf.mxu0
    %v385 = vadd.f32 0.0, %v384
    %386 = vmatmul.f32.gmra.mxu0 %v359
    %v387 = vpop.f32.mrf.mxu0
    %v388 = vadd.f32 0.0, %v387
    %389 = vmatmul.f32.gmra.mxu0 %v362
    %v390 = vpop.f32.mrf.mxu0
    %v391 = vadd.f32 0.0, %v390
    %392 = vdwg.mxu0
    %v393 = vrcp.pop %v342
    %v394 = vrcp.pop %v345
    %v395 = vrcp.pop %v348
    %v396 = vrcp.pop %v351
    %v397 = vmul.f32 %v382, %v393
    %v398 = vmul.f32 %v385, %v394
    %v399 = vmul.f32 %v388, %v395
    %v400 = vmul.f32 %v391, %v396
    %401 = vst [vmem:[#allocation11] sm:$0xff] %v397
    %402 = vst [vmem:[#allocation11 + $0x8] sm:$0xff] %v398
    %403 = vst [vmem:[#allocation11 + $0x10] sm:$0xff] %v399
    %404 = vst [vmem:[#allocation11 + $0x18] sm:$0xff] %v400
    // Predicated region
    $region42: #{tpu_custom_call.1} parent=1 // pred_check
      _
    $region43: #{tpu_custom_call.1} parent=1 // pred_check_branch
      %406 = sbr.rel (0) target = $region45
    $region44: #{tpu_custom_call.1} parent=1 // pred_region
      %408 = vsyncadd [#allocation4], 0
      %s409 = sshll.u32 [#allocation11], 4
      %s410 = int_to_ptr.vmem [resolvable:$true] %s409
      %s411 = sshll.u32 %s5, 4
      %s412 = int_to_ptr.hbm [resolvable:$true] %s411
      %417 = dma.vmem_to_hbm [thread:$0]  %s410, 512, %s412, [#allocation4], 128, 128, 8
    $region45: #{tpu_custom_call.1} parent=1 // pred_fallthru
      _
    // Predicated region
    $region46: #{tpu_custom_call.1} parent=1 // pred_check
      _
    $region47: #{tpu_custom_call.1} parent=1 // pred_check_branch
      %419 = sbr.rel (0) target = $region49
    $region48: #{tpu_custom_call.1} parent=1 // pred_region
      %421 = dma.done [#allocation4], 512
    $region49: #{tpu_custom_call.1} parent=1 // pred_fallthru
      _
    %422 = vsyncpa [#allocation3], 1
    %423 = vsyncpa [#allocation6], 1
    %424 = vsyncpa [#allocation9], 1
    %425 = vsyncpa [#allocation4], 1

</llo_original>
